<compile_context>
chip_gen: v5e
topology: v5e:2x2
jax: 0.10.0
libtpu: 0.0.40
codegen_flags: <defaults>
</compile_context>

<pallas_src>
import functools

import jax
import jax.numpy as jnp
from jax.experimental import pallas as pl
from jax.experimental.pallas import tpu as pltpu


# --------------- fused (embedding-gather + input-proj + LSTM recurrence + MLP head) kernel ---------------
def _fused_lstm_kernel(B, T,
                       tok_ref,   # (T*B, 1)  int32  time-major token ids (row = t*B + b)
                       eg_ref,    # (V, 4H)   f32    Emb @ W_ih^T + (b_ih+b_hh), gate order [i,f,o,g]
                       whh_ref,   # (H, 4H)   bf16   W_hh^T, gate order [i,f,o,g]
                       w1_ref,    # (H, 128)  bf16   fc1 weight^T, lane-padded
                       b1_ref,    # (1, 128)  f32    fc1 bias, lane-padded
                       w2_ref,    # (128,128) bf16   fc2 weight^T, row+lane padded
                       b2_ref,    # (1, 128)  f32    fc2 bias, lane-padded
                       o_ref):    # (T*B, 128) f32   logits (lane-padded), time-major
    H = whh_ref.shape[0]
    V = eg_ref.shape[0]
    N = T * B
    H3 = 3 * H

    # ---- phase 1: fused embedding gather + input projection (+bias) for ALL timesteps ----
    # One-hot selection matmul = exact row gather of the precomputed (V, 4H) table.
    ids = tok_ref[...]                                                  # (N, 1) int32
    onehot = (jax.lax.broadcasted_iota(jnp.int32, (N, V), 1) == ids).astype(jnp.float32)
    gates_x = jnp.dot(onehot, eg_ref[...],
                      preferred_element_type=jnp.float32)               # (N, 4H) f32, time-major

    # ---- phase 2: serial recurrence, fully unrolled (T is small & static) ----
    h = jnp.zeros((B, H), jnp.float32)
    c = jnp.zeros((B, H), jnp.float32)
    hs = []
    for t in range(T):
        gx_t = gates_x[t * B:(t + 1) * B, :]                            # contiguous-sublane static slice
        # recurrent projection: bf16 operands, f32 accumulation
        gates = gx_t + jnp.dot(h.astype(jnp.bfloat16), whh_ref[...],
                               preferred_element_type=jnp.float32)      # (B, 4H) f32
        ifo = jax.nn.sigmoid(gates[:, :H3])                             # one EUP launch: i, f, o
        g_g = jnp.tanh(gates[:, H3:])                                   # one EUP launch: g
        i_g = ifo[:, 0:H]
        f_g = ifo[:, H:2 * H]
        o_g = ifo[:, 2 * H:H3]
        c = f_g * c + i_g * g_g
        h = o_g * jnp.tanh(c)
        hs.append(h)                                                    # carried as values, no scratch

    # ---- phase 3: fused fc1 + ReLU + (eval-mode dropout = identity) + fc2 head ----
    hflat = jnp.concatenate(hs, axis=0)                                 # (N, H) f32, time-major
    z = jnp.dot(hflat.astype(jnp.bfloat16), w1_ref[...],
                preferred_element_type=jnp.float32) + b1_ref[...]       # (N, 128) f32
    z = jnp.maximum(z, 0.0)
    out = jnp.dot(z.astype(jnp.bfloat16), w2_ref[...],
                  preferred_element_type=jnp.float32) + b2_ref[...]     # (N, 128) f32
    o_ref[...] = out.astype(o_ref.dtype)                                # single lane-dense store


def fused_lstm_pallas(tok_tm, emb_gates, whh, w1, b1, w2, b2, *, B, T):
    N = T * B
    V, G4 = emb_gates.shape
    H = whh.shape[0]
    D1P = w1.shape[1]
    P = w2.shape[1]

    kernel = functools.partial(_fused_lstm_kernel, B, T)

    return pl.pallas_call(
        kernel,
        out_shape=jax.ShapeDtypeStruct((N, P), jnp.float32),
        grid_spec=pltpu.PrefetchScalarGridSpec(
            num_scalar_prefetch=0,
            grid=(1,),  # single grid point: whole problem is VMEM-resident
            in_specs=[
                pl.BlockSpec((N, 1), lambda i: (0, 0)),        # token ids (time-major)
                pl.BlockSpec((V, G4), lambda i: (0, 0)),       # folded Emb @ W_ih^T + bias
                pl.BlockSpec((H, G4), lambda i: (0, 0)),       # W_hh^T (bf16)
                pl.BlockSpec((H, D1P), lambda i: (0, 0)),      # fc1^T (bf16, lane-padded)
                pl.BlockSpec((1, D1P), lambda i: (0, 0)),      # fc1 bias (lane-padded)
                pl.BlockSpec((D1P, P), lambda i: (0, 0)),      # fc2^T (bf16, row+lane padded)
                pl.BlockSpec((1, P), lambda i: (0, 0)),        # fc2 bias (lane-padded)
            ],
            out_specs=pl.BlockSpec((N, P), lambda i: (0, 0)),
            scratch_shapes=[],
        ),
        compiler_params=pltpu.CompilerParams(
            dimension_semantics=("arbitrary",),
        ),
    )(tok_tm, emb_gates, whh, w1, b1, w2, b2)


# --------------------------------- parameter init (PyTorch-matching) ---------------------------------
def init_params(key, vocab_size, tagset_size, embedding_dim=64, hidden_dim=64):
    ks = jax.random.split(key, 9)
    # Embedding: N(0,1), padding_idx=0 row zeroed (PyTorch semantics at init)
    emb_w = jax.random.normal(ks[0], (vocab_size, embedding_dim), jnp.float32)
    emb_w = emb_w.at[0].set(0.0)
    # LSTM weights: U(-1/sqrt(H), 1/sqrt(H)), PyTorch gate order (i, f, g, o)
    k_lstm = 1.0 / jnp.sqrt(hidden_dim)
    w_ih = jax.random.uniform(ks[1], (4 * hidden_dim, embedding_dim), jnp.float32, -k_lstm, k_lstm)
    w_hh = jax.random.uniform(ks[2], (4 * hidden_dim, hidden_dim), jnp.float32, -k_lstm, k_lstm)
    b_ih = jax.random.uniform(ks[3], (4 * hidden_dim,), jnp.float32, -k_lstm, k_lstm)
    b_hh = jax.random.uniform(ks[4], (4 * hidden_dim,), jnp.float32, -k_lstm, k_lstm)
    # fc1: hidden_dim -> 32, fc2: 32 -> tagset_size (PyTorch Linear init incl. bias)
    k1 = 1.0 / jnp.sqrt(hidden_dim)
    w1 = jax.random.uniform(ks[5], (32, hidden_dim), jnp.float32, -k1, k1)
    b1 = jax.random.uniform(ks[6], (32,), jnp.float32, -k1, k1)
    k2 = 1.0 / jnp.sqrt(32.0)
    w2 = jax.random.uniform(ks[7], (tagset_size, 32), jnp.float32, -k2, k2)
    b2 = jax.random.uniform(ks[8], (tagset_size,), jnp.float32, -k2, k2)
    return dict(emb_w=emb_w, w_ih=w_ih, w_hh=w_hh, b_ih=b_ih, b_hh=b_hh,
                w1=w1, b1=b1, w2=w2, b2=b2)


# ------------------------------- one-time weight prep (hoisted out of forward) -------------------------------
def prepare_params(params):
    H = params["w_hh"].shape[1]
    D1 = params["w1"].shape[0]                      # 32
    tagset = params["w2"].shape[0]
    D1P = 128                                       # fc1 width padded to lane-dense 128
    P = 128 * ((tagset + 127) // 128)               # fc2 output padded to lane-dense width

    # Gate-block reorder (i, f, g, o) -> (i, f, o, g): sigmoid gates first, tanh gate last.
    cols = jnp.concatenate([jnp.arange(0, 2 * H),
                            jnp.arange(3 * H, 4 * H),
                            jnp.arange(2 * H, 3 * H)])
    w_ih_t = params["w_ih"].T[:, cols]                              # (E, 4H) f32
    w_hh_t = params["w_hh"].T[:, cols]                              # (H, 4H) f32
    bias = (params["b_ih"] + params["b_hh"])[cols]                  # (4H,)  f32

    # Fold embedding table + input projection + bias (exact f32: gathering rows of
    # Emb @ W_ih^T + b is identical to computing x @ W_ih^T + b per token).
    emb_gates = params["emb_w"] @ w_ih_t + bias[None, :]            # (V, 4H) f32

    w1_pad = jnp.zeros((H, D1P), jnp.bfloat16).at[:, :D1].set(params["w1"].T.astype(jnp.bfloat16))
    b1_pad = jnp.zeros((1, D1P), jnp.float32).at[:, :D1].set(params["b1"][None, :])
    w2_pad = jnp.zeros((D1P, P), jnp.bfloat16).at[:D1, :tagset].set(params["w2"].T.astype(jnp.bfloat16))
    b2_pad = jnp.zeros((1, P), jnp.float32).at[:, :tagset].set(params["b2"][None, :])

    return dict(emb_gates=emb_gates,
                whh=w_hh_t.astype(jnp.bfloat16),
                w1=w1_pad, b1=b1_pad, w2=w2_pad, b2=b2_pad)


# --------------------------------------------- forward ---------------------------------------------
@functools.partial(jax.jit, static_argnames=("tagset",))
def lstm_forward(prep, tokens, *, tagset):
    B, T = tokens.shape
    P = prep["w2"].shape[1]

    # Time-major token rows (row = t*B + b); tiny int transpose is the only per-call prep.
    tok_tm = tokens.astype(jnp.int32).T.reshape(T * B, 1)

    out_tm = fused_lstm_pallas(tok_tm, prep["emb_gates"], prep["whh"],
                               prep["w1"], prep["b1"], prep["w2"], prep["b2"], B=B, T=T)

    # (T*B, P) time-major -> (B, T, tagset); padded logit columns are exactly 0 and sliced off
    # before any downstream softmax/argmax.
    return out_tm.reshape(T, B, P).transpose(1, 0, 2)[:, :, :tagset]


if __name__ == "__main__":
    vocab_size = 100
    tagset_size = 10
    B, T = 2, 8

    key = jax.random.PRNGKey(0)
    k_param, k_tok = jax.random.split(key)
    params = init_params(k_param, vocab_size, tagset_size)
    prep = prepare_params(params)   # one-time weight prep (not part of the per-forward cost)
    tokens = jax.random.randint(k_tok, (B, T), 0, vocab_size, dtype=jnp.int32)

    out = lstm_forward(prep, tokens, tagset=tagset_size)
    jax.block_until_ready(out)
    assert out.shape == (B, T, tagset_size), out.shape
    print("KERNEL_OK")
</pallas_src>

<mosaic_0001>
module attributes {stable_mosaic.version = 11 : i64} {
  func.func @_fused_lstm_kernel(%arg0: i32, %arg1: memref<16x1xi32, #tpu.memory_space<vmem>>, %arg2: memref<100x256xf32, #tpu.memory_space<vmem>>, %arg3: memref<64x256xbf16, #tpu.memory_space<vmem>>, %arg4: memref<64x128xbf16, #tpu.memory_space<vmem>>, %arg5: memref<1x128xf32, #tpu.memory_space<vmem>>, %arg6: memref<128x128xbf16, #tpu.memory_space<vmem>>, %arg7: memref<1x128xf32, #tpu.memory_space<vmem>>, %arg8: memref<16x128xf32, #tpu.memory_space<vmem>>) attributes {dimension_semantics = [#tpu.dimension_semantics<arbitrary>], iteration_bounds = array<i64: 1>, scalar_prefetch = 0 : i64, scratch_operands = 0 : i64, tpu.core_type = #tpu.core_type<tc>, window_params = [{pipeline_mode = #tpu.pipeline_mode<synchronous>, transform_indices = @transform_0, window_bounds = array<i64: 16, 1>}, {pipeline_mode = #tpu.pipeline_mode<synchronous>, transform_indices = @transform_1, window_bounds = array<i64: 100, 256>}, {pipeline_mode = #tpu.pipeline_mode<synchronous>, transform_indices = @transform_2, window_bounds = array<i64: 64, 256>}, {pipeline_mode = #tpu.pipeline_mode<synchronous>, transform_indices = @transform_3, window_bounds = array<i64: 64, 128>}, {pipeline_mode = #tpu.pipeline_mode<synchronous>, transform_indices = @transform_4, window_bounds = array<i64: 1, 128>}, {pipeline_mode = #tpu.pipeline_mode<synchronous>, transform_indices = @transform_5, window_bounds = array<i64: 128, 128>}, {pipeline_mode = #tpu.pipeline_mode<synchronous>, transform_indices = @transform_6, window_bounds = array<i64: 1, 128>}, {pipeline_mode = #tpu.pipeline_mode<synchronous>, transform_indices = @transform_7, window_bounds = array<i64: 16, 128>}]} {
    %c0 = arith.constant 0 : index
    %c0_0 = arith.constant 0 : index
    %0 = vector.load %arg1[%c0, %c0_0] : memref<16x1xi32, #tpu.memory_space<vmem>>, vector<16x1xi32>
    %1 = tpu.iota {dimensions = array<i32: 1>} : vector<16x100xi32>
    %2 = vector.broadcast %0 : vector<16x1xi32> to vector<16x100xi32>
    %3 = arith.cmpi eq, %1, %2 : vector<16x100xi32>
    %4 = arith.extui %3 : vector<16x100xi1> to vector<16x100xi32>
    %5 = arith.sitofp %4 : vector<16x100xi32> to vector<16x100xf32>
    %c0_1 = arith.constant 0 : index
    %c0_2 = arith.constant 0 : index
    %6 = vector.load %arg2[%c0_1, %c0_2] : memref<100x256xf32, #tpu.memory_space<vmem>>, vector<100x256xf32>
    %cst = arith.constant dense<0.000000e+00> : vector<16x256xf32>
    %7 = tpu.matmul %5, %6, %cst {dimension_numbers = #tpu.dot_dimension_numbers<[1], [0], [0], [1], [0, 0, 1, 1], [], []>} : vector<16x100xf32>, vector<100x256xf32>, vector<16x256xf32> -> vector<16x256xf32>
    %cst_3 = arith.constant 0.000000e+00 : f32
    %8 = vector.broadcast %cst_3 : f32 to vector<2x64xf32>
    %cst_4 = arith.constant 0.000000e+00 : f32
    %9 = vector.broadcast %cst_4 : f32 to vector<2x64xf32>
    %10 = vector.extract_strided_slice %7 {offsets = [0, 0], sizes = [2, 256], strides = [1, 1]} : vector<16x256xf32> to vector<2x256xf32>
    %11 = arith.truncf %8 : vector<2x64xf32> to vector<2x64xbf16>
    %c0_5 = arith.constant 0 : index
    %c0_6 = arith.constant 0 : index
    %12 = vector.load %arg3[%c0_5, %c0_6] : memref<64x256xbf16, #tpu.memory_space<vmem>>, vector<64x256xbf16>
    %cst_7 = arith.constant dense<0.000000e+00> : vector<2x256xf32>
    %13 = tpu.matmul %11, %12, %cst_7 {dimension_numbers = #tpu.dot_dimension_numbers<[1], [0], [0], [1], [0, 0, 1, 1], [], []>} : vector<2x64xbf16>, vector<64x256xbf16>, vector<2x256xf32> -> vector<2x256xf32>
    %14 = arith.addf %10, %13 : vector<2x256xf32>
    %15 = vector.extract_strided_slice %14 {offsets = [0, 0], sizes = [2, 192], strides = [1, 1]} : vector<2x256xf32> to vector<2x192xf32>
    %16 = arith.negf %15 : vector<2x192xf32>
    %17 = math.exp %16 : vector<2x192xf32>
    %cst_8 = arith.constant 1.000000e+00 : f32
    %18 = vector.broadcast %cst_8 : f32 to vector<2x192xf32>
    %19 = arith.addf %18, %17 : vector<2x192xf32>
    %20 = arith.divf %18, %19 : vector<2x192xf32>
    %21 = vector.extract_strided_slice %14 {offsets = [0, 192], sizes = [2, 64], strides = [1, 1]} : vector<2x256xf32> to vector<2x64xf32>
    %22 = math.tanh %21 : vector<2x64xf32>
    %23 = vector.extract_strided_slice %20 {offsets = [0, 0], sizes = [2, 64], strides = [1, 1]} : vector<2x192xf32> to vector<2x64xf32>
    %24 = vector.extract_strided_slice %20 {offsets = [0, 64], sizes = [2, 64], strides = [1, 1]} : vector<2x192xf32> to vector<2x64xf32>
    %25 = vector.extract_strided_slice %20 {offsets = [0, 128], sizes = [2, 64], strides = [1, 1]} : vector<2x192xf32> to vector<2x64xf32>
    %26 = arith.mulf %24, %9 : vector<2x64xf32>
    %27 = arith.mulf %23, %22 : vector<2x64xf32>
    %28 = arith.addf %26, %27 : vector<2x64xf32>
    %29 = math.tanh %28 : vector<2x64xf32>
    %30 = arith.mulf %25, %29 : vector<2x64xf32>
    %31 = vector.extract_strided_slice %7 {offsets = [2, 0], sizes = [2, 256], strides = [1, 1]} : vector<16x256xf32> to vector<2x256xf32>
    %32 = arith.truncf %30 : vector<2x64xf32> to vector<2x64xbf16>
    %c0_9 = arith.constant 0 : index
    %c0_10 = arith.constant 0 : index
    %33 = vector.load %arg3[%c0_9, %c0_10] : memref<64x256xbf16, #tpu.memory_space<vmem>>, vector<64x256xbf16>
    %cst_11 = arith.constant dense<0.000000e+00> : vector<2x256xf32>
    %34 = tpu.matmul %32, %33, %cst_11 {dimension_numbers = #tpu.dot_dimension_numbers<[1], [0], [0], [1], [0, 0, 1, 1], [], []>} : vector<2x64xbf16>, vector<64x256xbf16>, vector<2x256xf32> -> vector<2x256xf32>
    %35 = arith.addf %31, %34 : vector<2x256xf32>
    %36 = vector.extract_strided_slice %35 {offsets = [0, 0], sizes = [2, 192], strides = [1, 1]} : vector<2x256xf32> to vector<2x192xf32>
    %37 = arith.negf %36 : vector<2x192xf32>
    %38 = math.exp %37 : vector<2x192xf32>
    %cst_12 = arith.constant 1.000000e+00 : f32
    %39 = vector.broadcast %cst_12 : f32 to vector<2x192xf32>
    %40 = arith.addf %39, %38 : vector<2x192xf32>
    %41 = arith.divf %39, %40 : vector<2x192xf32>
    %42 = vector.extract_strided_slice %35 {offsets = [0, 192], sizes = [2, 64], strides = [1, 1]} : vector<2x256xf32> to vector<2x64xf32>
    %43 = math.tanh %42 : vector<2x64xf32>
    %44 = vector.extract_strided_slice %41 {offsets = [0, 0], sizes = [2, 64], strides = [1, 1]} : vector<2x192xf32> to vector<2x64xf32>
    %45 = vector.extract_strided_slice %41 {offsets = [0, 64], sizes = [2, 64], strides = [1, 1]} : vector<2x192xf32> to vector<2x64xf32>
    %46 = vector.extract_strided_slice %41 {offsets = [0, 128], sizes = [2, 64], strides = [1, 1]} : vector<2x192xf32> to vector<2x64xf32>
    %47 = arith.mulf %45, %28 : vector<2x64xf32>
    %48 = arith.mulf %44, %43 : vector<2x64xf32>
    %49 = arith.addf %47, %48 : vector<2x64xf32>
    %50 = math.tanh %49 : vector<2x64xf32>
    %51 = arith.mulf %46, %50 : vector<2x64xf32>
    %52 = vector.extract_strided_slice %7 {offsets = [4, 0], sizes = [2, 256], strides = [1, 1]} : vector<16x256xf32> to vector<2x256xf32>
    %53 = arith.truncf %51 : vector<2x64xf32> to vector<2x64xbf16>
    %c0_13 = arith.constant 0 : index
    %c0_14 = arith.constant 0 : index
    %54 = vector.load %arg3[%c0_13, %c0_14] : memref<64x256xbf16, #tpu.memory_space<vmem>>, vector<64x256xbf16>
    %cst_15 = arith.constant dense<0.000000e+00> : vector<2x256xf32>
    %55 = tpu.matmul %53, %54, %cst_15 {dimension_numbers = #tpu.dot_dimension_numbers<[1], [0], [0], [1], [0, 0, 1, 1], [], []>} : vector<2x64xbf16>, vector<64x256xbf16>, vector<2x256xf32> -> vector<2x256xf32>
    %56 = arith.addf %52, %55 : vector<2x256xf32>
    %57 = vector.extract_strided_slice %56 {offsets = [0, 0], sizes = [2, 192], strides = [1, 1]} : vector<2x256xf32> to vector<2x192xf32>
    %58 = arith.negf %57 : vector<2x192xf32>
    %59 = math.exp %58 : vector<2x192xf32>
    %cst_16 = arith.constant 1.000000e+00 : f32
    %60 = vector.broadcast %cst_16 : f32 to vector<2x192xf32>
    %61 = arith.addf %60, %59 : vector<2x192xf32>
    %62 = arith.divf %60, %61 : vector<2x192xf32>
    %63 = vector.extract_strided_slice %56 {offsets = [0, 192], sizes = [2, 64], strides = [1, 1]} : vector<2x256xf32> to vector<2x64xf32>
    %64 = math.tanh %63 : vector<2x64xf32>
    %65 = vector.extract_strided_slice %62 {offsets = [0, 0], sizes = [2, 64], strides = [1, 1]} : vector<2x192xf32> to vector<2x64xf32>
    %66 = vector.extract_strided_slice %62 {offsets = [0, 64], sizes = [2, 64], strides = [1, 1]} : vector<2x192xf32> to vector<2x64xf32>
    %67 = vector.extract_strided_slice %62 {offsets = [0, 128], sizes = [2, 64], strides = [1, 1]} : vector<2x192xf32> to vector<2x64xf32>
    %68 = arith.mulf %66, %49 : vector<2x64xf32>
    %69 = arith.mulf %65, %64 : vector<2x64xf32>
    %70 = arith.addf %68, %69 : vector<2x64xf32>
    %71 = math.tanh %70 : vector<2x64xf32>
    %72 = arith.mulf %67, %71 : vector<2x64xf32>
    %73 = vector.extract_strided_slice %7 {offsets = [6, 0], sizes = [2, 256], strides = [1, 1]} : vector<16x256xf32> to vector<2x256xf32>
    %74 = arith.truncf %72 : vector<2x64xf32> to vector<2x64xbf16>
    %c0_17 = arith.constant 0 : index
    %c0_18 = arith.constant 0 : index
    %75 = vector.load %arg3[%c0_17, %c0_18] : memref<64x256xbf16, #tpu.memory_space<vmem>>, vector<64x256xbf16>
    %cst_19 = arith.constant dense<0.000000e+00> : vector<2x256xf32>
    %76 = tpu.matmul %74, %75, %cst_19 {dimension_numbers = #tpu.dot_dimension_numbers<[1], [0], [0], [1], [0, 0, 1, 1], [], []>} : vector<2x64xbf16>, vector<64x256xbf16>, vector<2x256xf32> -> vector<2x256xf32>
    %77 = arith.addf %73, %76 : vector<2x256xf32>
    %78 = vector.extract_strided_slice %77 {offsets = [0, 0], sizes = [2, 192], strides = [1, 1]} : vector<2x256xf32> to vector<2x192xf32>
    %79 = arith.negf %78 : vector<2x192xf32>
    %80 = math.exp %79 : vector<2x192xf32>
    %cst_20 = arith.constant 1.000000e+00 : f32
    %81 = vector.broadcast %cst_20 : f32 to vector<2x192xf32>
    %82 = arith.addf %81, %80 : vector<2x192xf32>
    %83 = arith.divf %81, %82 : vector<2x192xf32>
    %84 = vector.extract_strided_slice %77 {offsets = [0, 192], sizes = [2, 64], strides = [1, 1]} : vector<2x256xf32> to vector<2x64xf32>
    %85 = math.tanh %84 : vector<2x64xf32>
    %86 = vector.extract_strided_slice %83 {offsets = [0, 0], sizes = [2, 64], strides = [1, 1]} : vector<2x192xf32> to vector<2x64xf32>
    %87 = vector.extract_strided_slice %83 {offsets = [0, 64], sizes = [2, 64], strides = [1, 1]} : vector<2x192xf32> to vector<2x64xf32>
    %88 = vector.extract_strided_slice %83 {offsets = [0, 128], sizes = [2, 64], strides = [1, 1]} : vector<2x192xf32> to vector<2x64xf32>
    %89 = arith.mulf %87, %70 : vector<2x64xf32>
    %90 = arith.mulf %86, %85 : vector<2x64xf32>
    %91 = arith.addf %89, %90 : vector<2x64xf32>
    %92 = math.tanh %91 : vector<2x64xf32>
    %93 = arith.mulf %88, %92 : vector<2x64xf32>
    %94 = vector.extract_strided_slice %7 {offsets = [8, 0], sizes = [2, 256], strides = [1, 1]} : vector<16x256xf32> to vector<2x256xf32>
    %95 = arith.truncf %93 : vector<2x64xf32> to vector<2x64xbf16>
    %c0_21 = arith.constant 0 : index
    %c0_22 = arith.constant 0 : index
    %96 = vector.load %arg3[%c0_21, %c0_22] : memref<64x256xbf16, #tpu.memory_space<vmem>>, vector<64x256xbf16>
    %cst_23 = arith.constant dense<0.000000e+00> : vector<2x256xf32>
    %97 = tpu.matmul %95, %96, %cst_23 {dimension_numbers = #tpu.dot_dimension_numbers<[1], [0], [0], [1], [0, 0, 1, 1], [], []>} : vector<2x64xbf16>, vector<64x256xbf16>, vector<2x256xf32> -> vector<2x256xf32>
    %98 = arith.addf %94, %97 : vector<2x256xf32>
    %99 = vector.extract_strided_slice %98 {offsets = [0, 0], sizes = [2, 192], strides = [1, 1]} : vector<2x256xf32> to vector<2x192xf32>
    %100 = arith.negf %99 : vector<2x192xf32>
    %101 = math.exp %100 : vector<2x192xf32>
    %cst_24 = arith.constant 1.000000e+00 : f32
    %102 = vector.broadcast %cst_24 : f32 to vector<2x192xf32>
    %103 = arith.addf %102, %101 : vector<2x192xf32>
    %104 = arith.divf %102, %103 : vector<2x192xf32>
    %105 = vector.extract_strided_slice %98 {offsets = [0, 192], sizes = [2, 64], strides = [1, 1]} : vector<2x256xf32> to vector<2x64xf32>
    %106 = math.tanh %105 : vector<2x64xf32>
    %107 = vector.extract_strided_slice %104 {offsets = [0, 0], sizes = [2, 64], strides = [1, 1]} : vector<2x192xf32> to vector<2x64xf32>
    %108 = vector.extract_strided_slice %104 {offsets = [0, 64], sizes = [2, 64], strides = [1, 1]} : vector<2x192xf32> to vector<2x64xf32>
    %109 = vector.extract_strided_slice %104 {offsets = [0, 128], sizes = [2, 64], strides = [1, 1]} : vector<2x192xf32> to vector<2x64xf32>
    %110 = arith.mulf %108, %91 : vector<2x64xf32>
    %111 = arith.mulf %107, %106 : vector<2x64xf32>
    %112 = arith.addf %110, %111 : vector<2x64xf32>
    %113 = math.tanh %112 : vector<2x64xf32>
    %114 = arith.mulf %109, %113 : vector<2x64xf32>
    %115 = vector.extract_strided_slice %7 {offsets = [10, 0], sizes = [2, 256], strides = [1, 1]} : vector<16x256xf32> to vector<2x256xf32>
    %116 = arith.truncf %114 : vector<2x64xf32> to vector<2x64xbf16>
    %c0_25 = arith.constant 0 : index
    %c0_26 = arith.constant 0 : index
    %117 = vector.load %arg3[%c0_25, %c0_26] : memref<64x256xbf16, #tpu.memory_space<vmem>>, vector<64x256xbf16>
    %cst_27 = arith.constant dense<0.000000e+00> : vector<2x256xf32>
    %118 = tpu.matmul %116, %117, %cst_27 {dimension_numbers = #tpu.dot_dimension_numbers<[1], [0], [0], [1], [0, 0, 1, 1], [], []>} : vector<2x64xbf16>, vector<64x256xbf16>, vector<2x256xf32> -> vector<2x256xf32>
    %119 = arith.addf %115, %118 : vector<2x256xf32>
    %120 = vector.extract_strided_slice %119 {offsets = [0, 0], sizes = [2, 192], strides = [1, 1]} : vector<2x256xf32> to vector<2x192xf32>
    %121 = arith.negf %120 : vector<2x192xf32>
    %122 = math.exp %121 : vector<2x192xf32>
    %cst_28 = arith.constant 1.000000e+00 : f32
    %123 = vector.broadcast %cst_28 : f32 to vector<2x192xf32>
    %124 = arith.addf %123, %122 : vector<2x192xf32>
    %125 = arith.divf %123, %124 : vector<2x192xf32>
    %126 = vector.extract_strided_slice %119 {offsets = [0, 192], sizes = [2, 64], strides = [1, 1]} : vector<2x256xf32> to vector<2x64xf32>
    %127 = math.tanh %126 : vector<2x64xf32>
    %128 = vector.extract_strided_slice %125 {offsets = [0, 0], sizes = [2, 64], strides = [1, 1]} : vector<2x192xf32> to vector<2x64xf32>
    %129 = vector.extract_strided_slice %125 {offsets = [0, 64], sizes = [2, 64], strides = [1, 1]} : vector<2x192xf32> to vector<2x64xf32>
    %130 = vector.extract_strided_slice %125 {offsets = [0, 128], sizes = [2, 64], strides = [1, 1]} : vector<2x192xf32> to vector<2x64xf32>
    %131 = arith.mulf %129, %112 : vector<2x64xf32>
    %132 = arith.mulf %128, %127 : vector<2x64xf32>
    %133 = arith.addf %131, %132 : vector<2x64xf32>
    %134 = math.tanh %133 : vector<2x64xf32>
    %135 = arith.mulf %130, %134 : vector<2x64xf32>
    %136 = vector.extract_strided_slice %7 {offsets = [12, 0], sizes = [2, 256], strides = [1, 1]} : vector<16x256xf32> to vector<2x256xf32>
    %137 = arith.truncf %135 : vector<2x64xf32> to vector<2x64xbf16>
    %c0_29 = arith.constant 0 : index
    %c0_30 = arith.constant 0 : index
    %138 = vector.load %arg3[%c0_29, %c0_30] : memref<64x256xbf16, #tpu.memory_space<vmem>>, vector<64x256xbf16>
    %cst_31 = arith.constant dense<0.000000e+00> : vector<2x256xf32>
    %139 = tpu.matmul %137, %138, %cst_31 {dimension_numbers = #tpu.dot_dimension_numbers<[1], [0], [0], [1], [0, 0, 1, 1], [], []>} : vector<2x64xbf16>, vector<64x256xbf16>, vector<2x256xf32> -> vector<2x256xf32>
    %140 = arith.addf %136, %139 : vector<2x256xf32>
    %141 = vector.extract_strided_slice %140 {offsets = [0, 0], sizes = [2, 192], strides = [1, 1]} : vector<2x256xf32> to vector<2x192xf32>
    %142 = arith.negf %141 : vector<2x192xf32>
    %143 = math.exp %142 : vector<2x192xf32>
    %cst_32 = arith.constant 1.000000e+00 : f32
    %144 = vector.broadcast %cst_32 : f32 to vector<2x192xf32>
    %145 = arith.addf %144, %143 : vector<2x192xf32>
    %146 = arith.divf %144, %145 : vector<2x192xf32>
    %147 = vector.extract_strided_slice %140 {offsets = [0, 192], sizes = [2, 64], strides = [1, 1]} : vector<2x256xf32> to vector<2x64xf32>
    %148 = math.tanh %147 : vector<2x64xf32>
    %149 = vector.extract_strided_slice %146 {offsets = [0, 0], sizes = [2, 64], strides = [1, 1]} : vector<2x192xf32> to vector<2x64xf32>
    %150 = vector.extract_strided_slice %146 {offsets = [0, 64], sizes = [2, 64], strides = [1, 1]} : vector<2x192xf32> to vector<2x64xf32>
    %151 = vector.extract_strided_slice %146 {offsets = [0, 128], sizes = [2, 64], strides = [1, 1]} : vector<2x192xf32> to vector<2x64xf32>
    %152 = arith.mulf %150, %133 : vector<2x64xf32>
    %153 = arith.mulf %149, %148 : vector<2x64xf32>
    %154 = arith.addf %152, %153 : vector<2x64xf32>
    %155 = math.tanh %154 : vector<2x64xf32>
    %156 = arith.mulf %151, %155 : vector<2x64xf32>
    %157 = vector.extract_strided_slice %7 {offsets = [14, 0], sizes = [2, 256], strides = [1, 1]} : vector<16x256xf32> to vector<2x256xf32>
    %158 = arith.truncf %156 : vector<2x64xf32> to vector<2x64xbf16>
    %c0_33 = arith.constant 0 : index
    %c0_34 = arith.constant 0 : index
    %159 = vector.load %arg3[%c0_33, %c0_34] : memref<64x256xbf16, #tpu.memory_space<vmem>>, vector<64x256xbf16>
    %cst_35 = arith.constant dense<0.000000e+00> : vector<2x256xf32>
    %160 = tpu.matmul %158, %159, %cst_35 {dimension_numbers = #tpu.dot_dimension_numbers<[1], [0], [0], [1], [0, 0, 1, 1], [], []>} : vector<2x64xbf16>, vector<64x256xbf16>, vector<2x256xf32> -> vector<2x256xf32>
    %161 = arith.addf %157, %160 : vector<2x256xf32>
    %162 = vector.extract_strided_slice %161 {offsets = [0, 0], sizes = [2, 192], strides = [1, 1]} : vector<2x256xf32> to vector<2x192xf32>
    %163 = arith.negf %162 : vector<2x192xf32>
    %164 = math.exp %163 : vector<2x192xf32>
    %cst_36 = arith.constant 1.000000e+00 : f32
    %165 = vector.broadcast %cst_36 : f32 to vector<2x192xf32>
    %166 = arith.addf %165, %164 : vector<2x192xf32>
    %167 = arith.divf %165, %166 : vector<2x192xf32>
    %168 = vector.extract_strided_slice %161 {offsets = [0, 192], sizes = [2, 64], strides = [1, 1]} : vector<2x256xf32> to vector<2x64xf32>
    %169 = math.tanh %168 : vector<2x64xf32>
    %170 = vector.extract_strided_slice %167 {offsets = [0, 0], sizes = [2, 64], strides = [1, 1]} : vector<2x192xf32> to vector<2x64xf32>
    %171 = vector.extract_strided_slice %167 {offsets = [0, 64], sizes = [2, 64], strides = [1, 1]} : vector<2x192xf32> to vector<2x64xf32>
    %172 = vector.extract_strided_slice %167 {offsets = [0, 128], sizes = [2, 64], strides = [1, 1]} : vector<2x192xf32> to vector<2x64xf32>
    %173 = arith.mulf %171, %154 : vector<2x64xf32>
    %174 = arith.mulf %170, %169 : vector<2x64xf32>
    %175 = arith.addf %173, %174 : vector<2x64xf32>
    %176 = math.tanh %175 : vector<2x64xf32>
    %177 = arith.mulf %172, %176 : vector<2x64xf32>
    %178 = tpu.concatenate %30, %51, %72, %93, %114, %135, %156, %177 in 0 : vector<2x64xf32>, vector<2x64xf32>, vector<2x64xf32>, vector<2x64xf32>, vector<2x64xf32>, vector<2x64xf32>, vector<2x64xf32>, vector<2x64xf32> -> vector<16x64xf32>
    %179 = arith.truncf %178 : vector<16x64xf32> to vector<16x64xbf16>
    %c0_37 = arith.constant 0 : index
    %c0_38 = arith.constant 0 : index
    %180 = vector.load %arg4[%c0_37, %c0_38] : memref<64x128xbf16, #tpu.memory_space<vmem>>, vector<64x128xbf16>
    %cst_39 = arith.constant dense<0.000000e+00> : vector<16x128xf32>
    %181 = tpu.matmul %179, %180, %cst_39 {dimension_numbers = #tpu.dot_dimension_numbers<[1], [0], [0], [1], [0, 0, 1, 1], [], []>} : vector<16x64xbf16>, vector<64x128xbf16>, vector<16x128xf32> -> vector<16x128xf32>
    %c0_40 = arith.constant 0 : index
    %c0_41 = arith.constant 0 : index
    %182 = vector.load %arg5[%c0_40, %c0_41] : memref<1x128xf32, #tpu.memory_space<vmem>>, vector<1x128xf32>
    %183 = vector.broadcast %182 : vector<1x128xf32> to vector<16x128xf32>
    %184 = arith.addf %181, %183 : vector<16x128xf32>
    %cst_42 = arith.constant 0.000000e+00 : f32
    %185 = vector.broadcast %cst_42 : f32 to vector<16x128xf32>
    %186 = arith.maximumf %184, %185 : vector<16x128xf32>
    %187 = arith.truncf %186 : vector<16x128xf32> to vector<16x128xbf16>
    %c0_43 = arith.constant 0 : index
    %c0_44 = arith.constant 0 : index
    %188 = vector.load %arg6[%c0_43, %c0_44] : memref<128x128xbf16, #tpu.memory_space<vmem>>, vector<128x128xbf16>
    %cst_45 = arith.constant dense<0.000000e+00> : vector<16x128xf32>
    %189 = tpu.matmul %187, %188, %cst_45 {dimension_numbers = #tpu.dot_dimension_numbers<[1], [0], [0], [1], [0, 0, 1, 1], [], []>} : vector<16x128xbf16>, vector<128x128xbf16>, vector<16x128xf32> -> vector<16x128xf32>
    %c0_46 = arith.constant 0 : index
    %c0_47 = arith.constant 0 : index
    %190 = vector.load %arg7[%c0_46, %c0_47] : memref<1x128xf32, #tpu.memory_space<vmem>>, vector<1x128xf32>
    %191 = vector.broadcast %190 : vector<1x128xf32> to vector<16x128xf32>
    %192 = arith.addf %189, %191 : vector<16x128xf32>
    %c0_48 = arith.constant 0 : index
    %c0_49 = arith.constant 0 : index
    %193 = vector.load %arg8[%c0_48, %c0_49] : memref<16x128xf32, #tpu.memory_space<vmem>>, vector<16x128xf32>
    tpu.vector_store %arg8[%c0_48, %c0_49], %192 {strides = array<i32>} : memref<16x128xf32, #tpu.memory_space<vmem>>, vector<16x128xf32>,
    return
  }
  func.func @transform_0(%arg0: i32) -> (i32, i32) {
    %c0_i32 = arith.constant 0 : i32
    %c0_i32_0 = arith.constant 0 : i32
    %c0_i32_1 = arith.constant 0 : i32
    return %c0_i32, %c0_i32_0 : i32, i32
  }
  func.func @transform_1(%arg0: i32) -> (i32, i32) {
    %c0_i32 = arith.constant 0 : i32
    %c0_i32_0 = arith.constant 0 : i32
    %c0_i32_1 = arith.constant 0 : i32
    return %c0_i32, %c0_i32_0 : i32, i32
  }
  func.func @transform_2(%arg0: i32) -> (i32, i32) {
    %c0_i32 = arith.constant 0 : i32
    %c0_i32_0 = arith.constant 0 : i32
    %c0_i32_1 = arith.constant 0 : i32
    return %c0_i32, %c0_i32_0 : i32, i32
  }
  func.func @transform_3(%arg0: i32) -> (i32, i32) {
    %c0_i32 = arith.constant 0 : i32
    %c0_i32_0 = arith.constant 0 : i32
    %c0_i32_1 = arith.constant 0 : i32
    return %c0_i32, %c0_i32_0 : i32, i32
  }
  func.func @transform_4(%arg0: i32) -> (i32, i32) {
    %c0_i32 = arith.constant 0 : i32
    %c0_i32_0 = arith.constant 0 : i32
    %c0_i32_1 = arith.constant 0 : i32
    return %c0_i32, %c0_i32_0 : i32, i32
  }
  func.func @transform_5(%arg0: i32) -> (i32, i32) {
    %c0_i32 = arith.constant 0 : i32
    %c0_i32_0 = arith.constant 0 : i32
    %c0_i32_1 = arith.constant 0 : i32
    return %c0_i32, %c0_i32_0 : i32, i32
  }
  func.func @transform_6(%arg0: i32) -> (i32, i32) {
    %c0_i32 = arith.constant 0 : i32
    %c0_i32_0 = arith.constant 0 : i32
    %c0_i32_1 = arith.constant 0 : i32
    return %c0_i32, %c0_i32_0 : i32, i32
  }
  func.func @transform_7(%arg0: i32) -> (i32, i32) {
    %c0_i32 = arith.constant 0 : i32
    %c0_i32_0 = arith.constant 0 : i32
    %c0_i32_1 = arith.constant 0 : i32
    return %c0_i32, %c0_i32_0 : i32, i32
  }
}

</mosaic_0001>

<llo_original>
// kernel: lstm_forward.1
$region0: #{lstm_forward.1}
  #allocation0 [shape = 'u32[]', space=smem, size = 0x4, offset = 0x4, fixed_abs, tag = 'smem constant byte address 0x4 - core index']
  #allocation1 [shape = 'u32[72,128]{1,0:T(1,128)}', space=vmem, size = 0x9000, scoped, tag = 'internal scratch']
  %s0 = inlined_call_operand.vmem [shape: s32[16,1], index: 0, kind: input, shape index: {}]
  %s1 = inlined_call_operand.hbm [shape: f32[100,256], index: 1, kind: input, shape index: {}]
  %s2 = inlined_call_operand.hbm [shape: bf16[64,256], index: 2, kind: input, shape index: {}]
  %s3 = inlined_call_operand.vmem [shape: bf16[64,128], index: 3, kind: input, shape index: {}]
  %s4 = inlined_call_operand.vmem [shape: f32[1,128], index: 4, kind: input, shape index: {}]
  %s5 = inlined_call_operand.hbm [shape: bf16[128,128], index: 5, kind: input, shape index: {}]
  %s6 = inlined_call_operand.vmem [shape: f32[1,128], index: 6, kind: input, shape index: {}]
  %s7 = inlined_call_operand.vmem [shape: f32[16,128], index: 7, kind: output, shape index: {}]
  %s8 = sld [smem:[#allocation0]]
  $region50: #{lstm_forward.1} parent=0
    _
  %s10 = ssub.s32 1, %s8
  %s11 = scalar_select 0, %s10, %s8
  $region1: #{lstm_forward.1} parent=0
    #allocation2 [shape = 'u8[106496]{0}', space=vmem, size = 0x1a000, scoped, tag = 'input window, operand 1, single buffered']
    #allocation3 [shape = 's32[1]{0}', space=sflag, size = 0x4, scoped, tag = 'scoped memory for lstm_forward.1']
    #allocation4 [shape = 'u8[32768]{0}', space=vmem, size = 0x8000, scoped, tag = 'input window, operand 2, single buffered']
    #allocation5 [shape = 's32[1]{0}', space=sflag, size = 0x4, scoped, tag = 'scoped memory for lstm_forward.1']
    #allocation6 [shape = 'u8[32768]{0}', space=vmem, size = 0x8000, scoped, tag = 'input window, operand 5, single buffered']
    %12 = vsyncpa [#allocation3], 0
    %13 = vsyncpa [#allocation5], 0
    // Predicated region
    $region2: #{lstm_forward.1} parent=1 // pred_check
      _
    $region3: #{lstm_forward.1} parent=1 // pred_check_branch
      %15 = sbr.rel (0) target = $region5
    $region4: #{lstm_forward.1} parent=1 // pred_region
      _
    $region5: #{lstm_forward.1} parent=1 // pred_fallthru
      _
    // Predicated region
    $region6: #{lstm_forward.1} parent=1 // pred_check
      _
    $region7: #{lstm_forward.1} parent=1 // pred_check_branch
      %17 = sbr.rel (0) target = $region9
    $region8: #{lstm_forward.1} parent=1 // pred_region
      %19 = vsyncadd [#allocation3], 0
      %s20 = sshll.u32 %s1, 4
      %s21 = int_to_ptr.hbm [resolvable:$true] %s20
      %s22 = sshll.u32 [#allocation2], 4
      %s23 = int_to_ptr.vmem [resolvable:$true] %s22
      %28 = dma.hbm_to_vmem [thread:$0]  %s21, 3328, %s23, [#allocation3], 256, 256, 16
    $region9: #{lstm_forward.1} parent=1 // pred_fallthru
      _
    // Predicated region
    $region10: #{lstm_forward.1} parent=1 // pred_check
      _
    $region11: #{lstm_forward.1} parent=1 // pred_check_branch
      %30 = sbr.rel (0) target = $region13
    $region12: #{lstm_forward.1} parent=1 // pred_region
      %32 = vsyncadd [#allocation5], 0
      %s33 = sshll.u32 %s2, 4
      %s34 = int_to_ptr.hbm [resolvable:$true] %s33
      %s35 = sshll.u32 [#allocation4], 4
      %s36 = int_to_ptr.vmem [resolvable:$true] %s35
      %41 = dma.hbm_to_vmem [thread:$0]  %s34, 1024, %s36, [#allocation5], 128, 128, 8
    $region13: #{lstm_forward.1} parent=1 // pred_fallthru
      _
    // Predicated region
    $region14: #{lstm_forward.1} parent=1 // pred_check
      _
    $region15: #{lstm_forward.1} parent=1 // pred_check_branch
      %43 = sbr.rel (0) target = $region17
    $region16: #{lstm_forward.1} parent=1 // pred_region
      _
    $region17: #{lstm_forward.1} parent=1 // pred_fallthru
      _
    // Predicated region
    $region18: #{lstm_forward.1} parent=1 // pred_check
      _
    $region19: #{lstm_forward.1} parent=1 // pred_check_branch
      %45 = sbr.rel (0) target = $region21
    $region20: #{lstm_forward.1} parent=1 // pred_region
      _
    $region21: #{lstm_forward.1} parent=1 // pred_fallthru
      _
    // Predicated region
    $region22: #{lstm_forward.1} parent=1 // pred_check
      _
    $region23: #{lstm_forward.1} parent=1 // pred_check_branch
      %47 = sbr.rel (0) target = $region25
    $region24: #{lstm_forward.1} parent=1 // pred_region
      %49 = vsyncadd [#allocation5], 0
      %s50 = sshll.u32 %s5, 4
      %s51 = int_to_ptr.hbm [resolvable:$true] %s50
      %s52 = sshll.u32 [#allocation6], 4
      %s53 = int_to_ptr.vmem [resolvable:$true] %s52
      %58 = dma.hbm_to_vmem [thread:$0]  %s51, 1024, %s53, [#allocation5], 64, 64, 4
    $region25: #{lstm_forward.1} parent=1 // pred_fallthru
      _
    // Predicated region
    $region26: #{lstm_forward.1} parent=1 // pred_check
      _
    $region27: #{lstm_forward.1} parent=1 // pred_check_branch
      %60 = sbr.rel (0) target = $region29
    $region28: #{lstm_forward.1} parent=1 // pred_region
      _
    $region29: #{lstm_forward.1} parent=1 // pred_fallthru
      _
    // Predicated region
    $region30: #{lstm_forward.1} parent=1 // pred_check
      _
    $region31: #{lstm_forward.1} parent=1 // pred_check_branch
      %62 = sbr.rel (0) target = $region33
    $region32: #{lstm_forward.1} parent=1 // pred_region
      %64 = dma.done [#allocation3], 3328
    $region33: #{lstm_forward.1} parent=1 // pred_fallthru
      _
    // Predicated region
    $region34: #{lstm_forward.1} parent=1 // pred_check
      _
    $region35: #{lstm_forward.1} parent=1 // pred_check_branch
      %66 = sbr.rel (0) target = $region37
    $region36: #{lstm_forward.1} parent=1 // pred_region
      %68 = dma.done [#allocation5], 1024
    $region37: #{lstm_forward.1} parent=1 // pred_fallthru
      _
    // Predicated region
    $region38: #{lstm_forward.1} parent=1 // pred_check
      _
    $region39: #{lstm_forward.1} parent=1 // pred_check_branch
      %70 = sbr.rel (0) target = $region41
    $region40: #{lstm_forward.1} parent=1 // pred_region
      %72 = dma.done [#allocation5], 1024
    $region41: #{lstm_forward.1} parent=1 // pred_fallthru
      _
    %v74 = vld [vmem:[%s0] sm:$0xff]
    %v75 = vld [vmem:[%s0 + $0x8] sm:$0xff]
    %v76 = vlaneseq
    %v77 = vand.u32 %v76, 127
    %78 = vset.pattern.permute.xlu0 0
    %79 = vperm.xlu0 %78, %v74
    %v80 = vpop.permute.xlu0 %79
    %81 = vset.pattern.permute.xlu0 0
    %82 = vperm.xlu0 %81, %v75
    %v83 = vpop.permute.xlu0 %82
    %vm84 = vcmp.eq.s32.totalorder %v77, %v80
    %vm85 = vcmp.eq.s32.totalorder %v77, %v83
    %v86 = vsel %vm84, 1, 0
    %v87 = vsel %vm85, 1, 0
    %v88 = vcvt.s32.f32 %v86
    %v89 = vcvt.s32.f32 %v87
    %v90 = vld [vmem:[#allocation2] sm:$0xff]
    %v91 = vld [vmem:[#allocation2 + $0x8] sm:$0xff]
    %v92 = vld [vmem:[#allocation2 + $0x10] sm:$0xff]
    %v93 = vld [vmem:[#allocation2 + $0x18] sm:$0xff]
    %v94 = vld [vmem:[#allocation2 + $0x20] sm:$0xff]
    %v95 = vld [vmem:[#allocation2 + $0x28] sm:$0xff]
    %v96 = vld [vmem:[#allocation2 + $0x30] sm:$0xff]
    %v97 = vld [vmem:[#allocation2 + $0x38] sm:$0xff]
    %v98 = vld [vmem:[#allocation2 + $0x40] sm:$0xff]
    %v99 = vld [vmem:[#allocation2 + $0x48] sm:$0xff]
    %v100 = vld [vmem:[#allocation2 + $0x50] sm:$0xff]
    %v101 = vld [vmem:[#allocation2 + $0x58] sm:$0xff]
    %v102 = vld [vmem:[#allocation2 + $0x60] sm:$0xff]
    %v103 = vld [vmem:[#allocation2 + $0x68] sm:$0xff]
    %v104 = vld [vmem:[#allocation2 + $0x70] sm:$0xff]
    %v105 = vld [vmem:[#allocation2 + $0x78] sm:$0xff]
    %v106 = vld [vmem:[#allocation2 + $0x80] sm:$0xff]
    %v107 = vld [vmem:[#allocation2 + $0x88] sm:$0xff]
    %v108 = vld [vmem:[#allocation2 + $0x90] sm:$0xff]
    %v109 = vld [vmem:[#allocation2 + $0x98] sm:$0xff]
    %v110 = vld [vmem:[#allocation2 + $0xa0] sm:$0xff]
    %v111 = vld [vmem:[#allocation2 + $0xa8] sm:$0xff]
    %v112 = vld [vmem:[#allocation2 + $0xb0] sm:$0xff]
    %v113 = vld [vmem:[#allocation2 + $0xb8] sm:$0xff]
    %v114 = vld [vmem:[#allocation2 + $0xc0] sm:$0xf]
    %v115 = vld [vmem:[#allocation2 + $0xc8] sm:$0xf]
    %vm116 = vcmask 818176
    %v118 = vsel %vm116, %v88, 0
    %v121 = vsel %vm116, %v89, 0
    %vm123 = vcmask 1043456
    %v125 = vsel %vm123, %v114, 0
    %v128 = vsel %vm123, %v115, 0
    %130 = vmatpush.msra.mxu0 0.0
    %131 = vmatpush.msra.mxu0 0.0
    %132 = vmatpush.msra.mxu0 0.0
    %133 = vmatpush.msra.mxu0 %v125
    %134 = vmatpush.msra.mxu0 %v112
    %135 = vmatpush.msra.mxu0 %v110
    %136 = vmatpush.msra.mxu0 %v108
    %137 = vmatpush.msra.mxu0 %v106
    %138 = vmatpush.msra.mxu0 %v104
    %139 = vmatpush.msra.mxu0 %v102
    %140 = vmatpush.msra.mxu0 %v100
    %141 = vmatpush.msra.mxu0 %v98
    %142 = vmatpush.msra.mxu0 %v96
    %143 = vmatpush.msra.mxu0 %v94
    %144 = vmatpush.msra.mxu0 %v92
    %145 = vmatpush.msra.mxu0 %v90
    %146 = vmatmul.f32.gmra.mxu0 %v118
    %v147 = vpop.f32.mrf.mxu0
    %v148 = vadd.f32 0.0, %v147
    %149 = vmatmul.f32.gmra.mxu0 %v121
    %v150 = vpop.f32.mrf.mxu0
    %v151 = vadd.f32 0.0, %v150
    %152 = vdwg.mxu0
    %153 = vmatpush.msra.mxu0 0.0
    %154 = vmatpush.msra.mxu0 0.0
    %155 = vmatpush.msra.mxu0 0.0
    %156 = vmatpush.msra.mxu0 %v128
    %157 = vmatpush.msra.mxu0 %v113
    %158 = vmatpush.msra.mxu0 %v111
    %159 = vmatpush.msra.mxu0 %v109
    %160 = vmatpush.msra.mxu0 %v107
    %161 = vmatpush.msra.mxu0 %v105
    %162 = vmatpush.msra.mxu0 %v103
    %163 = vmatpush.msra.mxu0 %v101
    %164 = vmatpush.msra.mxu0 %v99
    %165 = vmatpush.msra.mxu0 %v97
    %166 = vmatpush.msra.mxu0 %v95
    %167 = vmatpush.msra.mxu0 %v93
    %168 = vmatpush.msra.mxu0 %v91
    %169 = vmatmul.f32.gmra.mxu0 %v118
    %v170 = vpop.f32.mrf.mxu0
    %v171 = vadd.f32 0.0, %v170
    %172 = vmatmul.f32.gmra.mxu0 %v121
    %v173 = vpop.f32.mrf.mxu0
    %v174 = vadd.f32 0.0, %v173
    %175 = vdwg.mxu0
    %v176 = vld [vmem:[#allocation4] sm:$0xff]
    %v177 = vld [vmem:[#allocation4 + $0x8] sm:$0xff]
    %v178 = vld [vmem:[#allocation4 + $0x10] sm:$0xff]
    %v179 = vld [vmem:[#allocation4 + $0x18] sm:$0xff]
    %v180 = vld [vmem:[#allocation4 + $0x20] sm:$0xff]
    %v181 = vld [vmem:[#allocation4 + $0x28] sm:$0xff]
    %v182 = vld [vmem:[#allocation4 + $0x30] sm:$0xff]
    %v183 = vld [vmem:[#allocation4 + $0x38] sm:$0xff]
    %v192 = vunpack.c.l.b16 %v176
    %v193 = vunpack.c.h.b16 %v176
    %v194 = vunpack.c.l.b16 %v177
    %v195 = vunpack.c.h.b16 %v177
    %v196 = vunpack.c.l.b16 %v178
    %v197 = vunpack.c.h.b16 %v178
    %v198 = vunpack.c.l.b16 %v179
    %v199 = vunpack.c.h.b16 %v179
    %v200 = vunpack.c.l.b16 %v180
    %v201 = vunpack.c.h.b16 %v180
    %v202 = vunpack.c.l.b16 %v181
    %v203 = vunpack.c.h.b16 %v181
    %v204 = vunpack.c.l.b16 %v182
    %v205 = vunpack.c.h.b16 %v182
    %v206 = vunpack.c.l.b16 %v183
    %v207 = vunpack.c.h.b16 %v183
    %v208 = vpack.c.b16 %v194, %v192
    %v209 = vpack.c.b16 %v195, %v193
    %v210 = vpack.c.b16 %v198, %v196
    %v211 = vpack.c.b16 %v199, %v197
    %v212 = vpack.c.b16 %v202, %v200
    %v213 = vpack.c.b16 %v203, %v201
    %v214 = vpack.c.b16 %v206, %v204
    %v215 = vpack.c.b16 %v207, %v205
    %vm224 = vcmask 523264
    %v226 = vsel %vm224, 0, 0
    %228 = vmatpush.bf16.msra.mxu0 0
    %229 = vmatpush.bf16.msra.mxu0 0
    %230 = vmatpush.bf16.msra.mxu0 0
    %231 = vmatpush.bf16.msra.mxu0 0
    %232 = vmatpush.bf16.msra.mxu0 %v214
    %233 = vmatpush.bf16.msra.mxu0 %v212
    %234 = vmatpush.bf16.msra.mxu0 %v210
    %235 = vmatpush.bf16.msra.mxu0 %v208
    %236 = vmatmul.bf16.gmra.mxu0 %v226
    %v237 = vpop.f32.mrf.mxu0
    %v238 = vadd.f32 0.0, %v237
    %v239 = vpop.f32.mrf.mxu0
    %240 = vdwg.mxu0
    %241 = vmatpush.bf16.msra.mxu0 0
    %242 = vmatpush.bf16.msra.mxu0 0
    %243 = vmatpush.bf16.msra.mxu0 0
    %244 = vmatpush.bf16.msra.mxu0 0
    %245 = vmatpush.bf16.msra.mxu0 %v215
    %246 = vmatpush.bf16.msra.mxu0 %v213
    %247 = vmatpush.bf16.msra.mxu0 %v211
    %248 = vmatpush.bf16.msra.mxu0 %v209
    %249 = vmatmul.bf16.gmra.mxu0 %v226
    %v250 = vpop.f32.mrf.mxu0
    %v251 = vadd.f32 0.0, %v250
    %v252 = vpop.f32.mrf.mxu0
    %253 = vdwg.mxu0
    %v254 = vadd.f32 %v148, %v238
    %v255 = vadd.f32 %v171, %v251
    %v256 = vxor.u32 %v254, 2147483648
    %v257 = vxor.u32 %v255, 2147483648
    %v258 = vmul.f32 %v256, 1.442695
    %v259 = vpow.pop %v258
    %v260 = vmul.f32 %v257, 1.442695
    %v261 = vpow.pop %v260
    %v262 = vadd.f32 %v259, 1.0
    %v263 = vadd.f32 %v261, 1.0
    %v264 = vrcp.pop %v262
    %v265 = vmul.f32 %v262, %v264
    %v266 = vsub.f32 1.0, %v265
    %v267 = vmul.f32 %v264, %v266
    %v268 = vadd.f32 %v264, %v267
    %vm269 = vweird.f32 %v262
    %vm270 = vweird.f32 %v264
    %vm271 = vmor %vm269, %vm270
    %v272 = vsel %vm271, %v264, %v268
    %v273 = vand.u32 2147483647, %v262
    %vm274 = vcmp.eq.f32.partialorder %v273, 8.507059e+37
    %v275 = vand.u32 %v262, 2147483648
    %v276 = vor.u32 1.1754944e-38, %v275
    %v277 = vsel %vm274, %v276, %v272
    %v278 = vmul.f32 1.0, %v277
    %v279 = vrcp.pop %v263
    %v280 = vmul.f32 %v263, %v279
    %v281 = vsub.f32 1.0, %v280
    %v282 = vmul.f32 %v279, %v281
    %v283 = vadd.f32 %v279, %v282
    %vm284 = vweird.f32 %v263
    %vm285 = vweird.f32 %v279
    %vm286 = vmor %vm284, %vm285
    %v287 = vsel %vm286, %v279, %v283
    %v288 = vand.u32 2147483647, %v263
    %vm289 = vcmp.eq.f32.partialorder %v288, 8.507059e+37
    %v290 = vand.u32 %v263, 2147483648
    %v291 = vor.u32 1.1754944e-38, %v290
    %v292 = vsel %vm289, %v291, %v287
    %v293 = vmul.f32 1.0, %v292
    %v294 = vtanh.pop %v255
    %v295 = vmul.f32 %v278, 0.0
    %297 = vrot.lane.b32.xlu0 %v294, 64
    %v298 = vpop.permute.xlu0 %297
    %v300 = vmul.f32 %v278, %v298
    %302 = vrot.lane.b32.xlu0 %v300, 64
    %v303 = vpop.permute.xlu0 %302
    %v305 = vadd.f32 %v295, %v303
    %v306 = vtanh.pop %v305
    %308 = vrot.lane.b32.xlu0 %v306, 64
    %v309 = vpop.permute.xlu0 %308
    %v311 = vmul.f32 %v293, %v309
    %v312 = vpack.c.bf16 %v311, %v311
    %v314 = vsel %vm224, %v312, 0
    %316 = vmatpush.bf16.msra.mxu0 0
    %317 = vmatpush.bf16.msra.mxu0 0
    %318 = vmatpush.bf16.msra.mxu0 0
    %319 = vmatpush.bf16.msra.mxu0 0
    %320 = vmatpush.bf16.msra.mxu0 %v214
    %321 = vmatpush.bf16.msra.mxu0 %v212
    %322 = vmatpush.bf16.msra.mxu0 %v210
    %323 = vmatpush.bf16.msra.mxu0 %v208
    %324 = vmatmul.bf16.gmra.mxu0 %v314
    %v325 = vpop.f32.mrf.mxu0
    %v326 = vadd.f32 0.0, %v325
    %v327 = vpop.f32.mrf.mxu0
    %328 = vdwg.mxu0
    %329 = vmatpush.bf16.msra.mxu0 0
    %330 = vmatpush.bf16.msra.mxu0 0
    %331 = vmatpush.bf16.msra.mxu0 0
    %332 = vmatpush.bf16.msra.mxu0 0
    %333 = vmatpush.bf16.msra.mxu0 %v215
    %334 = vmatpush.bf16.msra.mxu0 %v213
    %335 = vmatpush.bf16.msra.mxu0 %v211
    %336 = vmatpush.bf16.msra.mxu0 %v209
    %337 = vmatmul.bf16.gmra.mxu0 %v314
    %v338 = vpop.f32.mrf.mxu0
    %v339 = vadd.f32 0.0, %v338
    %v340 = vpop.f32.mrf.mxu0
    %341 = vdwg.mxu0
    %v344 = vrot.slane %v326, 6
    %v345 = vrot.slane %v339, 6
    %v348 = vadd.f32 %v148, %v344
    %v349 = vadd.f32 %v171, %v345
    %v350 = vxor.u32 %v348, 2147483648
    %v351 = vxor.u32 %v349, 2147483648
    %v352 = vmul.f32 %v350, 1.442695
    %v353 = vpow.pop %v352
    %v354 = vmul.f32 %v351, 1.442695
    %v355 = vpow.pop %v354
    %v356 = vadd.f32 %v353, 1.0
    %v357 = vadd.f32 %v355, 1.0
    %v358 = vrcp.pop %v356
    %v359 = vmul.f32 %v356, %v358
    %v360 = vsub.f32 1.0, %v359
    %v361 = vmul.f32 %v358, %v360
    %v362 = vadd.f32 %v358, %v361
    %vm363 = vweird.f32 %v356
    %vm364 = vweird.f32 %v358
    %vm365 = vmor %vm363, %vm364
    %v366 = vsel %vm365, %v358, %v362
    %v367 = vand.u32 2147483647, %v356
    %vm368 = vcmp.eq.f32.partialorder %v367, 8.507059e+37
    %v369 = vand.u32 %v356, 2147483648
    %v370 = vor.u32 1.1754944e-38, %v369
    %v371 = vsel %vm368, %v370, %v366
    %v372 = vmul.f32 1.0, %v371
    %v373 = vrcp.pop %v357
    %v374 = vmul.f32 %v357, %v373
    %v375 = vsub.f32 1.0, %v374
    %v376 = vmul.f32 %v373, %v375
    %v377 = vadd.f32 %v373, %v376
    %vm378 = vweird.f32 %v357
    %vm379 = vweird.f32 %v373
    %vm380 = vmor %vm378, %vm379
    %v381 = vsel %vm380, %v373, %v377
    %v382 = vand.u32 2147483647, %v357
    %vm383 = vcmp.eq.f32.partialorder %v382, 8.507059e+37
    %v384 = vand.u32 %v357, 2147483648
    %v385 = vor.u32 1.1754944e-38, %v384
    %v386 = vsel %vm383, %v385, %v381
    %v387 = vmul.f32 1.0, %v386
    %v388 = vtanh.pop %v349
    %v390 = vrot.slane %v305, 6
    %v392 = vmul.f32 %v372, %v390
    %394 = vrot.lane.b32.xlu0 %v388, 64
    %v395 = vpop.permute.xlu0 %394
    %v397 = vmul.f32 %v372, %v395
    %399 = vrot.lane.b32.xlu0 %v397, 64
    %v400 = vpop.permute.xlu0 %399
    %v402 = vadd.f32 %v392, %v400
    %v403 = vtanh.pop %v402
    %405 = vrot.lane.b32.xlu0 %v403, 64
    %v406 = vpop.permute.xlu0 %405
    %v408 = vmul.f32 %v387, %v406
    %v409 = vpack.c.bf16 %v408, %v408
    %v411 = vrot.slane %v409, 1
    %v413 = vsel %vm224, %v411, 0
    %415 = vmatpush.bf16.msra.mxu0 0
    %416 = vmatpush.bf16.msra.mxu0 0
    %417 = vmatpush.bf16.msra.mxu0 0
    %418 = vmatpush.bf16.msra.mxu0 0
    %419 = vmatpush.bf16.msra.mxu0 %v214
    %420 = vmatpush.bf16.msra.mxu0 %v212
    %421 = vmatpush.bf16.msra.mxu0 %v210
    %422 = vmatpush.bf16.msra.mxu0 %v208
    %423 = vmatmul.bf16.gmra.mxu0 %v413
    %v424 = vpop.f32.mrf.mxu0
    %v425 = vadd.f32 0.0, %v424
    %v426 = vpop.f32.mrf.mxu0
    %427 = vdwg.mxu0
    %428 = vmatpush.bf16.msra.mxu0 0
    %429 = vmatpush.bf16.msra.mxu0 0
    %430 = vmatpush.bf16.msra.mxu0 0
    %431 = vmatpush.bf16.msra.mxu0 0
    %432 = vmatpush.bf16.msra.mxu0 %v215
    %433 = vmatpush.bf16.msra.mxu0 %v213
    %434 = vmatpush.bf16.msra.mxu0 %v211
    %435 = vmatpush.bf16.msra.mxu0 %v209
    %436 = vmatmul.bf16.gmra.mxu0 %v413
    %v437 = vpop.f32.mrf.mxu0
    %v438 = vadd.f32 0.0, %v437
    %v439 = vpop.f32.mrf.mxu0
    %440 = vdwg.mxu0
    %v443 = vrot.slane %v425, 4
    %v444 = vrot.slane %v438, 4
    %v447 = vadd.f32 %v148, %v443
    %v448 = vadd.f32 %v171, %v444
    %v449 = vxor.u32 %v447, 2147483648
    %v450 = vxor.u32 %v448, 2147483648
    %v451 = vmul.f32 %v449, 1.442695
    %v452 = vpow.pop %v451
    %v453 = vmul.f32 %v450, 1.442695
    %v454 = vpow.pop %v453
    %v455 = vadd.f32 %v452, 1.0
    %v456 = vadd.f32 %v454, 1.0
    %v457 = vrcp.pop %v455
    %v458 = vmul.f32 %v455, %v457
    %v459 = vsub.f32 1.0, %v458
    %v460 = vmul.f32 %v457, %v459
    %v461 = vadd.f32 %v457, %v460
    %vm462 = vweird.f32 %v455
    %vm463 = vweird.f32 %v457
    %vm464 = vmor %vm462, %vm463
    %v465 = vsel %vm464, %v457, %v461
    %v466 = vand.u32 2147483647, %v455
    %vm467 = vcmp.eq.f32.partialorder %v466, 8.507059e+37
    %v468 = vand.u32 %v455, 2147483648
    %v469 = vor.u32 1.1754944e-38, %v468
    %v470 = vsel %vm467, %v469, %v465
    %v471 = vmul.f32 1.0, %v470
    %v472 = vrcp.pop %v456
    %v473 = vmul.f32 %v456, %v472
    %v474 = vsub.f32 1.0, %v473
    %v475 = vmul.f32 %v472, %v474
    %v476 = vadd.f32 %v472, %v475
    %vm477 = vweird.f32 %v456
    %vm478 = vweird.f32 %v472
    %vm479 = vmor %vm477, %vm478
    %v480 = vsel %vm479, %v472, %v476
    %v481 = vand.u32 2147483647, %v456
    %vm482 = vcmp.eq.f32.partialorder %v481, 8.507059e+37
    %v483 = vand.u32 %v456, 2147483648
    %v484 = vor.u32 1.1754944e-38, %v483
    %v485 = vsel %vm482, %v484, %v480
    %v486 = vmul.f32 1.0, %v485
    %v487 = vtanh.pop %v448
    %v489 = vrot.slane %v402, 6
    %v491 = vmul.f32 %v471, %v489
    %493 = vrot.lane.b32.xlu0 %v487, 64
    %v494 = vpop.permute.xlu0 %493
    %v496 = vmul.f32 %v471, %v494
    %498 = vrot.lane.b32.xlu0 %v496, 64
    %v499 = vpop.permute.xlu0 %498
    %v501 = vadd.f32 %v491, %v499
    %v502 = vtanh.pop %v501
    %504 = vrot.lane.b32.xlu0 %v502, 64
    %v505 = vpop.permute.xlu0 %504
    %v507 = vmul.f32 %v486, %v505
    %v508 = vpack.c.bf16 %v507, %v507
    %v510 = vrot.slane %v508, 2
    %v512 = vsel %vm224, %v510, 0
    %514 = vmatpush.bf16.msra.mxu0 0
    %515 = vmatpush.bf16.msra.mxu0 0
    %516 = vmatpush.bf16.msra.mxu0 0
    %517 = vmatpush.bf16.msra.mxu0 0
    %518 = vmatpush.bf16.msra.mxu0 %v214
    %519 = vmatpush.bf16.msra.mxu0 %v212
    %520 = vmatpush.bf16.msra.mxu0 %v210
    %521 = vmatpush.bf16.msra.mxu0 %v208
    %522 = vmatmul.bf16.gmra.mxu0 %v512
    %v523 = vpop.f32.mrf.mxu0
    %v524 = vadd.f32 0.0, %v523
    %v525 = vpop.f32.mrf.mxu0
    %526 = vdwg.mxu0
    %527 = vmatpush.bf16.msra.mxu0 0
    %528 = vmatpush.bf16.msra.mxu0 0
    %529 = vmatpush.bf16.msra.mxu0 0
    %530 = vmatpush.bf16.msra.mxu0 0
    %531 = vmatpush.bf16.msra.mxu0 %v215
    %532 = vmatpush.bf16.msra.mxu0 %v213
    %533 = vmatpush.bf16.msra.mxu0 %v211
    %534 = vmatpush.bf16.msra.mxu0 %v209
    %535 = vmatmul.bf16.gmra.mxu0 %v512
    %v536 = vpop.f32.mrf.mxu0
    %v537 = vadd.f32 0.0, %v536
    %v538 = vpop.f32.mrf.mxu0
    %539 = vdwg.mxu0
    %v542 = vrot.slane %v524, 2
    %v543 = vrot.slane %v537, 2
    %v546 = vadd.f32 %v148, %v542
    %v547 = vadd.f32 %v171, %v543
    %v548 = vxor.u32 %v546, 2147483648
    %v549 = vxor.u32 %v547, 2147483648
    %v550 = vmul.f32 %v548, 1.442695
    %v551 = vpow.pop %v550
    %v552 = vmul.f32 %v549, 1.442695
    %v553 = vpow.pop %v552
    %v554 = vadd.f32 %v551, 1.0
    %v555 = vadd.f32 %v553, 1.0
    %v556 = vrcp.pop %v554
    %v557 = vmul.f32 %v554, %v556
    %v558 = vsub.f32 1.0, %v557
    %v559 = vmul.f32 %v556, %v558
    %v560 = vadd.f32 %v556, %v559
    %vm561 = vweird.f32 %v554
    %vm562 = vweird.f32 %v556
    %vm563 = vmor %vm561, %vm562
    %v564 = vsel %vm563, %v556, %v560
    %v565 = vand.u32 2147483647, %v554
    %vm566 = vcmp.eq.f32.partialorder %v565, 8.507059e+37
    %v567 = vand.u32 %v554, 2147483648
    %v568 = vor.u32 1.1754944e-38, %v567
    %v569 = vsel %vm566, %v568, %v564
    %v570 = vmul.f32 1.0, %v569
    %v571 = vrcp.pop %v555
    %v572 = vmul.f32 %v555, %v571
    %v573 = vsub.f32 1.0, %v572
    %v574 = vmul.f32 %v571, %v573
    %v575 = vadd.f32 %v571, %v574
    %vm576 = vweird.f32 %v555
    %vm577 = vweird.f32 %v571
    %vm578 = vmor %vm576, %vm577
    %v579 = vsel %vm578, %v571, %v575
    %v580 = vand.u32 2147483647, %v555
    %vm581 = vcmp.eq.f32.partialorder %v580, 8.507059e+37
    %v582 = vand.u32 %v555, 2147483648
    %v583 = vor.u32 1.1754944e-38, %v582
    %v584 = vsel %vm581, %v583, %v579
    %v585 = vmul.f32 1.0, %v584
    %v586 = vtanh.pop %v547
    %v588 = vrot.slane %v501, 6
    %v590 = vmul.f32 %v570, %v588
    %592 = vrot.lane.b32.xlu0 %v586, 64
    %v593 = vpop.permute.xlu0 %592
    %v595 = vmul.f32 %v570, %v593
    %597 = vrot.lane.b32.xlu0 %v595, 64
    %v598 = vpop.permute.xlu0 %597
    %v600 = vadd.f32 %v590, %v598
    %v601 = vtanh.pop %v600
    %603 = vrot.lane.b32.xlu0 %v601, 64
    %v604 = vpop.permute.xlu0 %603
    %v606 = vmul.f32 %v585, %v604
    %v607 = vpack.c.bf16 %v606, %v606
    %v609 = vrot.slane %v607, 3
    %v611 = vsel %vm224, %v609, 0
    %613 = vmatpush.bf16.msra.mxu0 0
    %614 = vmatpush.bf16.msra.mxu0 0
    %615 = vmatpush.bf16.msra.mxu0 0
    %616 = vmatpush.bf16.msra.mxu0 0
    %617 = vmatpush.bf16.msra.mxu0 %v214
    %618 = vmatpush.bf16.msra.mxu0 %v212
    %619 = vmatpush.bf16.msra.mxu0 %v210
    %620 = vmatpush.bf16.msra.mxu0 %v208
    %621 = vmatmul.bf16.gmra.mxu0 %v611
    %v622 = vpop.f32.mrf.mxu0
    %v623 = vadd.f32 0.0, %v622
    %v624 = vpop.f32.mrf.mxu0
    %625 = vdwg.mxu0
    %626 = vmatpush.bf16.msra.mxu0 0
    %627 = vmatpush.bf16.msra.mxu0 0
    %628 = vmatpush.bf16.msra.mxu0 0
    %629 = vmatpush.bf16.msra.mxu0 0
    %630 = vmatpush.bf16.msra.mxu0 %v215
    %631 = vmatpush.bf16.msra.mxu0 %v213
    %632 = vmatpush.bf16.msra.mxu0 %v211
    %633 = vmatpush.bf16.msra.mxu0 %v209
    %634 = vmatmul.bf16.gmra.mxu0 %v611
    %v635 = vpop.f32.mrf.mxu0
    %v636 = vadd.f32 0.0, %v635
    %v637 = vpop.f32.mrf.mxu0
    %638 = vdwg.mxu0
    %v639 = vadd.f32 %v151, %v623
    %v640 = vadd.f32 %v174, %v636
    %v641 = vxor.u32 %v639, 2147483648
    %v642 = vxor.u32 %v640, 2147483648
    %v643 = vmul.f32 %v641, 1.442695
    %v644 = vpow.pop %v643
    %v645 = vmul.f32 %v642, 1.442695
    %v646 = vpow.pop %v645
    %v647 = vadd.f32 %v644, 1.0
    %v648 = vadd.f32 %v646, 1.0
    %v649 = vrcp.pop %v647
    %v650 = vmul.f32 %v647, %v649
    %v651 = vsub.f32 1.0, %v650
    %v652 = vmul.f32 %v649, %v651
    %v653 = vadd.f32 %v649, %v652
    %vm654 = vweird.f32 %v647
    %vm655 = vweird.f32 %v649
    %vm656 = vmor %vm654, %vm655
    %v657 = vsel %vm656, %v649, %v653
    %v658 = vand.u32 2147483647, %v647
    %vm659 = vcmp.eq.f32.partialorder %v658, 8.507059e+37
    %v660 = vand.u32 %v647, 2147483648
    %v661 = vor.u32 1.1754944e-38, %v660
    %v662 = vsel %vm659, %v661, %v657
    %v663 = vmul.f32 1.0, %v662
    %v664 = vrcp.pop %v648
    %v665 = vmul.f32 %v648, %v664
    %v666 = vsub.f32 1.0, %v665
    %v667 = vmul.f32 %v664, %v666
    %v668 = vadd.f32 %v664, %v667
    %vm669 = vweird.f32 %v648
    %vm670 = vweird.f32 %v664
    %vm671 = vmor %vm669, %vm670
    %v672 = vsel %vm671, %v664, %v668
    %v673 = vand.u32 2147483647, %v648
    %vm674 = vcmp.eq.f32.partialorder %v673, 8.507059e+37
    %v675 = vand.u32 %v648, 2147483648
    %v676 = vor.u32 1.1754944e-38, %v675
    %v677 = vsel %vm674, %v676, %v672
    %v678 = vmul.f32 1.0, %v677
    %v679 = vtanh.pop %v640
    %v681 = vrot.slane %v600, 6
    %v683 = vmul.f32 %v663, %v681
    %685 = vrot.lane.b32.xlu0 %v679, 64
    %v686 = vpop.permute.xlu0 %685
    %v688 = vmul.f32 %v663, %v686
    %690 = vrot.lane.b32.xlu0 %v688, 64
    %v691 = vpop.permute.xlu0 %690
    %v693 = vadd.f32 %v683, %v691
    %v694 = vtanh.pop %v693
    %696 = vrot.lane.b32.xlu0 %v694, 64
    %v697 = vpop.permute.xlu0 %696
    %v699 = vmul.f32 %v678, %v697
    %v700 = vpack.c.bf16 %v699, %v699
    %v702 = vsel %vm224, %v700, 0
    %704 = vmatpush.bf16.msra.mxu0 0
    %705 = vmatpush.bf16.msra.mxu0 0
    %706 = vmatpush.bf16.msra.mxu0 0
    %707 = vmatpush.bf16.msra.mxu0 0
    %708 = vmatpush.bf16.msra.mxu0 %v214
    %709 = vmatpush.bf16.msra.mxu0 %v212
    %710 = vmatpush.bf16.msra.mxu0 %v210
    %711 = vmatpush.bf16.msra.mxu0 %v208
    %712 = vmatmul.bf16.gmra.mxu0 %v702
    %v713 = vpop.f32.mrf.mxu0
    %v714 = vadd.f32 0.0, %v713
    %v715 = vpop.f32.mrf.mxu0
    %716 = vdwg.mxu0
    %717 = vmatpush.bf16.msra.mxu0 0
    %718 = vmatpush.bf16.msra.mxu0 0
    %719 = vmatpush.bf16.msra.mxu0 0
    %720 = vmatpush.bf16.msra.mxu0 0
    %721 = vmatpush.bf16.msra.mxu0 %v215
    %722 = vmatpush.bf16.msra.mxu0 %v213
    %723 = vmatpush.bf16.msra.mxu0 %v211
    %724 = vmatpush.bf16.msra.mxu0 %v209
    %725 = vmatmul.bf16.gmra.mxu0 %v702
    %v726 = vpop.f32.mrf.mxu0
    %v727 = vadd.f32 0.0, %v726
    %v728 = vpop.f32.mrf.mxu0
    %729 = vdwg.mxu0
    %v732 = vrot.slane %v714, 6
    %v733 = vrot.slane %v727, 6
    %v736 = vadd.f32 %v151, %v732
    %v737 = vadd.f32 %v174, %v733
    %v738 = vxor.u32 %v736, 2147483648
    %v739 = vxor.u32 %v737, 2147483648
    %v740 = vmul.f32 %v738, 1.442695
    %v741 = vpow.pop %v740
    %v742 = vmul.f32 %v739, 1.442695
    %v743 = vpow.pop %v742
    %v744 = vadd.f32 %v741, 1.0
    %v745 = vadd.f32 %v743, 1.0
    %v746 = vrcp.pop %v744
    %v747 = vmul.f32 %v744, %v746
    %v748 = vsub.f32 1.0, %v747
    %v749 = vmul.f32 %v746, %v748
    %v750 = vadd.f32 %v746, %v749
    %vm751 = vweird.f32 %v744
    %vm752 = vweird.f32 %v746
    %vm753 = vmor %vm751, %vm752
    %v754 = vsel %vm753, %v746, %v750
    %v755 = vand.u32 2147483647, %v744
    %vm756 = vcmp.eq.f32.partialorder %v755, 8.507059e+37
    %v757 = vand.u32 %v744, 2147483648
    %v758 = vor.u32 1.1754944e-38, %v757
    %v759 = vsel %vm756, %v758, %v754
    %v760 = vmul.f32 1.0, %v759
    %v761 = vrcp.pop %v745
    %v762 = vmul.f32 %v745, %v761
    %v763 = vsub.f32 1.0, %v762
    %v764 = vmul.f32 %v761, %v763
    %v765 = vadd.f32 %v761, %v764
    %vm766 = vweird.f32 %v745
    %vm767 = vweird.f32 %v761
    %vm768 = vmor %vm766, %vm767
    %v769 = vsel %vm768, %v761, %v765
    %v770 = vand.u32 2147483647, %v745
    %vm771 = vcmp.eq.f32.partialorder %v770, 8.507059e+37
    %v772 = vand.u32 %v745, 2147483648
    %v773 = vor.u32 1.1754944e-38, %v772
    %v774 = vsel %vm771, %v773, %v769
    %v775 = vmul.f32 1.0, %v774
    %v776 = vtanh.pop %v737
    %v778 = vrot.slane %v693, 6
    %v780 = vmul.f32 %v760, %v778
    %782 = vrot.lane.b32.xlu0 %v776, 64
    %v783 = vpop.permute.xlu0 %782
    %v785 = vmul.f32 %v760, %v783
    %787 = vrot.lane.b32.xlu0 %v785, 64
    %v788 = vpop.permute.xlu0 %787
    %v790 = vadd.f32 %v780, %v788
    %v791 = vtanh.pop %v790
    %793 = vrot.lane.b32.xlu0 %v791, 64
    %v794 = vpop.permute.xlu0 %793
    %v796 = vmul.f32 %v775, %v794
    %v797 = vpack.c.bf16 %v796, %v796
    %v799 = vrot.slane %v797, 1
    %v801 = vsel %vm224, %v799, 0
    %803 = vmatpush.bf16.msra.mxu0 0
    %804 = vmatpush.bf16.msra.mxu0 0
    %805 = vmatpush.bf16.msra.mxu0 0
    %806 = vmatpush.bf16.msra.mxu0 0
    %807 = vmatpush.bf16.msra.mxu0 %v214
    %808 = vmatpush.bf16.msra.mxu0 %v212
    %809 = vmatpush.bf16.msra.mxu0 %v210
    %810 = vmatpush.bf16.msra.mxu0 %v208
    %811 = vmatmul.bf16.gmra.mxu0 %v801
    %v812 = vpop.f32.mrf.mxu0
    %v813 = vadd.f32 0.0, %v812
    %v814 = vpop.f32.mrf.mxu0
    %815 = vdwg.mxu0
    %816 = vmatpush.bf16.msra.mxu0 0
    %817 = vmatpush.bf16.msra.mxu0 0
    %818 = vmatpush.bf16.msra.mxu0 0
    %819 = vmatpush.bf16.msra.mxu0 0
    %820 = vmatpush.bf16.msra.mxu0 %v215
    %821 = vmatpush.bf16.msra.mxu0 %v213
    %822 = vmatpush.bf16.msra.mxu0 %v211
    %823 = vmatpush.bf16.msra.mxu0 %v209
    %824 = vmatmul.bf16.gmra.mxu0 %v801
    %v825 = vpop.f32.mrf.mxu0
    %v826 = vadd.f32 0.0, %v825
    %v827 = vpop.f32.mrf.mxu0
    %828 = vdwg.mxu0
    %v831 = vrot.slane %v813, 4
    %v832 = vrot.slane %v826, 4
    %v835 = vadd.f32 %v151, %v831
    %v836 = vadd.f32 %v174, %v832
    %v837 = vxor.u32 %v835, 2147483648
    %v838 = vxor.u32 %v836, 2147483648
    %v839 = vmul.f32 %v837, 1.442695
    %v840 = vpow.pop %v839
    %v841 = vmul.f32 %v838, 1.442695
    %v842 = vpow.pop %v841
    %v843 = vadd.f32 %v840, 1.0
    %v844 = vadd.f32 %v842, 1.0
    %v845 = vrcp.pop %v843
    %v846 = vmul.f32 %v843, %v845
    %v847 = vsub.f32 1.0, %v846
    %v848 = vmul.f32 %v845, %v847
    %v849 = vadd.f32 %v845, %v848
    %vm850 = vweird.f32 %v843
    %vm851 = vweird.f32 %v845
    %vm852 = vmor %vm850, %vm851
    %v853 = vsel %vm852, %v845, %v849
    %v854 = vand.u32 2147483647, %v843
    %vm855 = vcmp.eq.f32.partialorder %v854, 8.507059e+37
    %v856 = vand.u32 %v843, 2147483648
    %v857 = vor.u32 1.1754944e-38, %v856
    %v858 = vsel %vm855, %v857, %v853
    %v859 = vmul.f32 1.0, %v858
    %v860 = vrcp.pop %v844
    %v861 = vmul.f32 %v844, %v860
    %v862 = vsub.f32 1.0, %v861
    %v863 = vmul.f32 %v860, %v862
    %v864 = vadd.f32 %v860, %v863
    %vm865 = vweird.f32 %v844
    %vm866 = vweird.f32 %v860
    %vm867 = vmor %vm865, %vm866
    %v868 = vsel %vm867, %v860, %v864
    %v869 = vand.u32 2147483647, %v844
    %vm870 = vcmp.eq.f32.partialorder %v869, 8.507059e+37
    %v871 = vand.u32 %v844, 2147483648
    %v872 = vor.u32 1.1754944e-38, %v871
    %v873 = vsel %vm870, %v872, %v868
    %v874 = vmul.f32 1.0, %v873
    %v875 = vtanh.pop %v836
    %v877 = vrot.slane %v790, 6
    %v879 = vmul.f32 %v859, %v877
    %881 = vrot.lane.b32.xlu0 %v875, 64
    %v882 = vpop.permute.xlu0 %881
    %v884 = vmul.f32 %v859, %v882
    %886 = vrot.lane.b32.xlu0 %v884, 64
    %v887 = vpop.permute.xlu0 %886
    %v889 = vadd.f32 %v879, %v887
    %v890 = vtanh.pop %v889
    %892 = vrot.lane.b32.xlu0 %v890, 64
    %v893 = vpop.permute.xlu0 %892
    %v895 = vmul.f32 %v874, %v893
    %v896 = vpack.c.bf16 %v895, %v895
    %v898 = vrot.slane %v896, 2
    %v900 = vsel %vm224, %v898, 0
    %902 = vmatpush.bf16.msra.mxu0 0
    %903 = vmatpush.bf16.msra.mxu0 0
    %904 = vmatpush.bf16.msra.mxu0 0
    %905 = vmatpush.bf16.msra.mxu0 0
    %906 = vmatpush.bf16.msra.mxu0 %v214
    %907 = vmatpush.bf16.msra.mxu0 %v212
    %908 = vmatpush.bf16.msra.mxu0 %v210
    %909 = vmatpush.bf16.msra.mxu0 %v208
    %910 = vmatmul.bf16.gmra.mxu0 %v900
    %v911 = vpop.f32.mrf.mxu0
    %v912 = vadd.f32 0.0, %v911
    %v913 = vpop.f32.mrf.mxu0
    %914 = vdwg.mxu0
    %915 = vmatpush.bf16.msra.mxu0 0
    %916 = vmatpush.bf16.msra.mxu0 0
    %917 = vmatpush.bf16.msra.mxu0 0
    %918 = vmatpush.bf16.msra.mxu0 0
    %919 = vmatpush.bf16.msra.mxu0 %v215
    %920 = vmatpush.bf16.msra.mxu0 %v213
    %921 = vmatpush.bf16.msra.mxu0 %v211
    %922 = vmatpush.bf16.msra.mxu0 %v209
    %923 = vmatmul.bf16.gmra.mxu0 %v900
    %v924 = vpop.f32.mrf.mxu0
    %v925 = vadd.f32 0.0, %v924
    %v926 = vpop.f32.mrf.mxu0
    %927 = vdwg.mxu0
    %v930 = vrot.slane %v912, 2
    %v931 = vrot.slane %v925, 2
    %v934 = vadd.f32 %v151, %v930
    %v935 = vadd.f32 %v174, %v931
    %v936 = vxor.u32 %v934, 2147483648
    %v937 = vxor.u32 %v935, 2147483648
    %v938 = vmul.f32 %v936, 1.442695
    %v939 = vpow.pop %v938
    %v940 = vmul.f32 %v937, 1.442695
    %v941 = vpow.pop %v940
    %v942 = vadd.f32 %v939, 1.0
    %v943 = vadd.f32 %v941, 1.0
    %v944 = vrcp.pop %v942
    %v945 = vmul.f32 %v942, %v944
    %v946 = vsub.f32 1.0, %v945
    %v947 = vmul.f32 %v944, %v946
    %v948 = vadd.f32 %v944, %v947
    %vm949 = vweird.f32 %v942
    %vm950 = vweird.f32 %v944
    %vm951 = vmor %vm949, %vm950
    %v952 = vsel %vm951, %v944, %v948
    %v953 = vand.u32 2147483647, %v942
    %vm954 = vcmp.eq.f32.partialorder %v953, 8.507059e+37
    %v955 = vand.u32 %v942, 2147483648
    %v956 = vor.u32 1.1754944e-38, %v955
    %v957 = vsel %vm954, %v956, %v952
    %v958 = vmul.f32 1.0, %v957
    %v959 = vrcp.pop %v943
    %v960 = vmul.f32 %v943, %v959
    %v961 = vsub.f32 1.0, %v960
    %v962 = vmul.f32 %v959, %v961
    %v963 = vadd.f32 %v959, %v962
    %vm964 = vweird.f32 %v943
    %vm965 = vweird.f32 %v959
    %vm966 = vmor %vm964, %vm965
    %v967 = vsel %vm966, %v959, %v963
    %v968 = vand.u32 2147483647, %v943
    %vm969 = vcmp.eq.f32.partialorder %v968, 8.507059e+37
    %v970 = vand.u32 %v943, 2147483648
    %v971 = vor.u32 1.1754944e-38, %v970
    %v972 = vsel %vm969, %v971, %v967
    %v973 = vmul.f32 1.0, %v972
    %v974 = vtanh.pop %v935
    %v976 = vrot.slane %v889, 6
    %v978 = vmul.f32 %v958, %v976
    %980 = vrot.lane.b32.xlu0 %v974, 64
    %v981 = vpop.permute.xlu0 %980
    %v983 = vmul.f32 %v958, %v981
    %985 = vrot.lane.b32.xlu0 %v983, 64
    %v986 = vpop.permute.xlu0 %985
    %v988 = vadd.f32 %v978, %v986
    %v989 = vtanh.pop %v988
    %991 = vrot.lane.b32.xlu0 %v989, 64
    %v992 = vpop.permute.xlu0 %991
    %v994 = vmul.f32 %v973, %v992
    %vm995 = vcmask 1041408
    %v996 = vsel %vm995, %v311, %v408
    %v997 = vsel %vm123, %v996, %v507
    %vm998 = vcmask 1045504
    %v999 = vsel %vm998, %v997, %v606
    %v1000 = vsel %vm995, %v699, %v796
    %v1001 = vsel %vm123, %v1000, %v895
    %v1002 = vsel %vm998, %v1001, %v994
    %v1003 = vpack.c.bf16 %v1002, %v999
    %v1004 = vld [vmem:[%s3] sm:$0xf]
    %v1005 = vld [vmem:[%s3 + $0x4] sm:$0xf]
    %v1006 = vld [vmem:[%s3 + $0x8] sm:$0xf]
    %v1007 = vld [vmem:[%s3 + $0xc] sm:$0xf]
    %v1008 = vld [vmem:[%s3 + $0x10] sm:$0xf]
    %v1009 = vld [vmem:[%s3 + $0x14] sm:$0xf]
    %v1010 = vld [vmem:[%s3 + $0x18] sm:$0xf]
    %v1011 = vld [vmem:[%s3 + $0x1c] sm:$0xf]
    %v1012 = vld [vmem:[%s4] sm:$0x1]
    %v1014 = vperm.slane %v1012, 0
    %v1024 = vunpack.c.l.b16 %v1004
    %v1025 = vunpack.c.l.b16 %v1005
    %v1026 = vunpack.c.l.b16 %v1006
    %v1027 = vunpack.c.l.b16 %v1007
    %v1028 = vunpack.c.l.b16 %v1008
    %v1029 = vunpack.c.l.b16 %v1009
    %v1030 = vunpack.c.l.b16 %v1010
    %v1031 = vunpack.c.l.b16 %v1011
    %v1032 = vpack.c.b16 %v1025, %v1024
    %v1033 = vpack.c.b16 %v1027, %v1026
    %v1034 = vpack.c.b16 %v1029, %v1028
    %v1035 = vpack.c.b16 %v1031, %v1030
    %v1041 = vsel %vm224, %v1003, 0
    %1043 = vmatpush.bf16.msra.mxu0 0
    %1044 = vmatpush.bf16.msra.mxu0 0
    %1045 = vmatpush.bf16.msra.mxu0 0
    %1046 = vmatpush.bf16.msra.mxu0 0
    %1047 = vmatpush.bf16.msra.mxu0 %v1035
    %1048 = vmatpush.bf16.msra.mxu0 %v1034
    %1049 = vmatpush.bf16.msra.mxu0 %v1033
    %1050 = vmatpush.bf16.msra.mxu0 %v1032
    %1051 = vmatmul.bf16.gmra.mxu0 %v1041
    %v1052 = vpop.f32.mrf.mxu0
    %v1053 = vadd.f32 %v1014, %v1052
    %v1054 = vpop.f32.mrf.mxu0
    %v1055 = vadd.f32 %v1014, %v1054
    %1056 = vdwg.mxu0
    %v1057 = vmax.f32 %v1053, 0.0
    %v1058 = vmax.f32 %v1055, 0.0
    %v1059 = vpack.c.bf16 %v1058, %v1057
    %v1060 = vld [vmem:[#allocation6] sm:$0xf]
    %v1061 = vld [vmem:[#allocation6 + $0x4] sm:$0xf]
    %v1062 = vld [vmem:[#allocation6 + $0x8] sm:$0xf]
    %v1063 = vld [vmem:[#allocation6 + $0xc] sm:$0xf]
    %v1064 = vld [vmem:[#allocation6 + $0x10] sm:$0xf]
    %v1065 = vld [vmem:[#allocation6 + $0x14] sm:$0xf]
    %v1066 = vld [vmem:[#allocation6 + $0x18] sm:$0xf]
    %v1067 = vld [vmem:[#allocation6 + $0x1c] sm:$0xf]
    %v1068 = vld [vmem:[#allocation6 + $0x20] sm:$0xf]
    %v1069 = vld [vmem:[#allocation6 + $0x24] sm:$0xf]
    %v1070 = vld [vmem:[#allocation6 + $0x28] sm:$0xf]
    %v1071 = vld [vmem:[#allocation6 + $0x2c] sm:$0xf]
    %v1072 = vld [vmem:[#allocation6 + $0x30] sm:$0xf]
    %v1073 = vld [vmem:[#allocation6 + $0x34] sm:$0xf]
    %v1074 = vld [vmem:[#allocation6 + $0x38] sm:$0xf]
    %v1075 = vld [vmem:[#allocation6 + $0x3c] sm:$0xf]
    %v1076 = vld [vmem:[%s6] sm:$0x1]
    %v1078 = vperm.slane %v1076, 0
    %v1096 = vunpack.c.l.b16 %v1060
    %v1097 = vunpack.c.l.b16 %v1061
    %v1098 = vunpack.c.l.b16 %v1062
    %v1099 = vunpack.c.l.b16 %v1063
    %v1100 = vunpack.c.l.b16 %v1064
    %v1101 = vunpack.c.l.b16 %v1065
    %v1102 = vunpack.c.l.b16 %v1066
    %v1103 = vunpack.c.l.b16 %v1067
    %v1104 = vunpack.c.l.b16 %v1068
    %v1105 = vunpack.c.l.b16 %v1069
    %v1106 = vunpack.c.l.b16 %v1070
    %v1107 = vunpack.c.l.b16 %v1071
    %v1108 = vunpack.c.l.b16 %v1072
    %v1109 = vunpack.c.l.b16 %v1073
    %v1110 = vunpack.c.l.b16 %v1074
    %v1111 = vunpack.c.l.b16 %v1075
    %v1112 = vpack.c.b16 %v1097, %v1096
    %v1113 = vpack.c.b16 %v1099, %v1098
    %v1114 = vpack.c.b16 %v1101, %v1100
    %v1115 = vpack.c.b16 %v1103, %v1102
    %v1116 = vpack.c.b16 %v1105, %v1104
    %v1117 = vpack.c.b16 %v1107, %v1106
    %v1118 = vpack.c.b16 %v1109, %v1108
    %v1119 = vpack.c.b16 %v1111, %v1110
    %1128 = vmatpush.bf16.msra.mxu0 %v1119
    %1129 = vmatpush.bf16.msra.mxu0 %v1118
    %1130 = vmatpush.bf16.msra.mxu0 %v1117
    %1131 = vmatpush.bf16.msra.mxu0 %v1116
    %1132 = vmatpush.bf16.msra.mxu0 %v1115
    %1133 = vmatpush.bf16.msra.mxu0 %v1114
    %1134 = vmatpush.bf16.msra.mxu0 %v1113
    %1135 = vmatpush.bf16.msra.mxu0 %v1112
    %1136 = vmatmul.bf16.gmra.mxu0 %v1059
    %v1137 = vpop.f32.mrf.mxu0
    %v1138 = vadd.f32 %v1078, %v1137
    %v1139 = vpop.f32.mrf.mxu0
    %v1140 = vadd.f32 %v1078, %v1139
    %1141 = vdwg.mxu0
    %1142 = vst [vmem:[%s7] sm:$0xff] %v1138
    %1143 = vst [vmem:[%s7 + $0x8] sm:$0xff] %v1140
    // Predicated region
    $region42: #{lstm_forward.1} parent=1 // pred_check
      _
    $region43: #{lstm_forward.1} parent=1 // pred_check_branch
      %1145 = sbr.rel (0) target = $region45
    $region44: #{lstm_forward.1} parent=1 // pred_region
      _
    $region45: #{lstm_forward.1} parent=1 // pred_fallthru
      _
    // Predicated region
    $region46: #{lstm_forward.1} parent=1 // pred_check
      _
    $region47: #{lstm_forward.1} parent=1 // pred_check_branch
      %1147 = sbr.rel (0) target = $region49
    $region48: #{lstm_forward.1} parent=1 // pred_region
      _
    $region49: #{lstm_forward.1} parent=1 // pred_fallthru
      _
    %1148 = vsyncpa [#allocation3], 1
    %1149 = vsyncpa [#allocation5], 1

</llo_original>
